<compile_context>
chip_gen: v6e
topology: v6e:2x2x1
jax: 0.10.0
libtpu: 0.0.40
codegen_flags: <defaults>
</compile_context>

<pallas_src>
import jax
import jax.numpy as jnp
from jax.experimental import pallas as pl
from jax.experimental.pallas import tpu as pltpu

ACTION_BOUND = 2.0
STATE_DIM = 4
HIDDEN = 64
N_OUT = 2            # real action width
N_PAD = 128          # in-kernel padded fc2 width (one MXU column group)
TILE_B_MAX = 2048    # batch tile cap (multiple of 8 for f32 sublanes)


def _round_up(x, m):
    return ((x + m - 1) // m) * m


def _compute_tile_b(B):
    """Static tile size: multiple of 8, capped, and >=2 grid steps when B > 8
    so a v7x chip can use both TensorCores (no-op on v5e/v6e)."""
    if B <= 8:
        return 8
    return min(TILE_B_MAX, _round_up((B + 1) // 2, 8))


def _actor_kernel(state_ref, w1_ref, b1_ref, w2_ref, b2_ref, out_ref):
    # state: [tile_b, 4], w1: [4, 64], b1: [1, 64], w2: [64, 128], b2: [1, 128]
    # fc1 on the MXU (it is nearly idle here); HIGHEST keeps f32 semantics on
    # bf16-only MXUs (v6e/v7x). Do NOT relax to DEFAULT.
    h = jnp.dot(state_ref[...], w1_ref[...],
                preferred_element_type=jnp.float32,
                precision=jax.lax.Precision.HIGHEST) + b1_ref[...]

    # softplus (matches PyTorch F.softplus: beta=1, threshold=20)
    h = jnp.where(h > 20.0, h, jnp.log1p(jnp.exp(jnp.minimum(h, 20.0))))

    # fc2 on the MXU; padded lanes of w2/b2 are zero and are never stored.
    a = jnp.dot(h, w2_ref[...],
                preferred_element_type=jnp.float32,
                precision=jax.lax.Precision.HIGHEST) + b2_ref[...]

    # Only the first N_OUT lanes are real; the HBM output is un-padded.
    out_ref[...] = (jnp.tanh(a[:, :N_OUT]) * ACTION_BOUND).astype(out_ref.dtype)


def prepare_actor_params(w1, b1, w2, b2):
    """One-time layout plumbing: pad fc2 to 128 columns for the MXU, reshape
    biases to 2-D rows. Call once (e.g. at init / after each optimizer step),
    not per forward."""
    w1p = w1.astype(jnp.float32)
    b1p = b1.reshape(1, HIDDEN).astype(jnp.float32)
    w2p = jnp.zeros((HIDDEN, N_PAD), jnp.float32).at[:, :N_OUT].set(w2)
    b2p = jnp.zeros((1, N_PAD), jnp.float32).at[:, :N_OUT].set(b2.reshape(1, N_OUT))
    return w1p, b1p, w2p, b2p


def actor_forward(state, params):
    """state: [B, 4] f32, params from prepare_actor_params -> action: [B, 2].

    Weights are stored transposed vs. PyTorch (w1: [4, 64], w2: [64, 2]) so the
    kernel computes x @ W + b directly.
    """
    # TODO(synk): at B~8 (the real DDPG rollout path) this is launch-overhead
    # bound; fuse the actor into the surrounding rollout/critic kernel instead.
    w1p, b1p, w2p, b2p = params
    B = state.shape[0]
    tile_b = _compute_tile_b(B)

    return pl.pallas_call(
        _actor_kernel,
        out_shape=jax.ShapeDtypeStruct((B, N_OUT), jnp.float32),
        grid=(pl.cdiv(B, tile_b),),
        in_specs=[
            pl.BlockSpec((tile_b, STATE_DIM), lambda i: (i, 0)),   # state tile
            pl.BlockSpec((STATE_DIM, HIDDEN), lambda i: (0, 0)),   # w1 (resident)
            pl.BlockSpec((1, HIDDEN), lambda i: (0, 0)),           # b1 (resident)
            pl.BlockSpec((HIDDEN, N_PAD), lambda i: (0, 0)),       # w2 padded (resident)
            pl.BlockSpec((1, N_PAD), lambda i: (0, 0)),            # b2 padded (resident)
        ],
        out_specs=pl.BlockSpec((tile_b, N_OUT), lambda i: (i, 0)),
        compiler_params=pltpu.CompilerParams(
            dimension_semantics=("parallel",)),
    )(state, w1p, b1p, w2p, b2p)


def init_params(key):
    """Deterministic init mimicking PyTorch's default Linear init
    (uniform(-1/sqrt(fan_in), +1/sqrt(fan_in)))."""
    k1, k2, k3, k4 = jax.random.split(key, 4)
    bound1 = 1.0 / jnp.sqrt(4.0)
    bound2 = 1.0 / jnp.sqrt(64.0)
    w1 = jax.random.uniform(k1, (STATE_DIM, HIDDEN), jnp.float32, -bound1, bound1)
    b1 = jax.random.uniform(k2, (HIDDEN,), jnp.float32, -bound1, bound1)
    w2 = jax.random.uniform(k3, (HIDDEN, N_OUT), jnp.float32, -bound2, bound2)
    b2 = jax.random.uniform(k4, (N_OUT,), jnp.float32, -bound2, bound2)
    return w1, b1, w2, b2


def _reference_forward(state, w1, b1, w2, b2):
    h = jnp.dot(state, w1, precision=jax.lax.Precision.HIGHEST) + b1
    h = jnp.where(h > 20.0, h, jnp.log1p(jnp.exp(jnp.minimum(h, 20.0))))
    a = jnp.dot(h, w2, precision=jax.lax.Precision.HIGHEST) + b2
    return jnp.tanh(a) * ACTION_BOUND


if __name__ == "__main__":
    key = jax.random.PRNGKey(0)
    k_params, k_small, k_rag, k_large = jax.random.split(key, 4)

    w1, b1, w2, b2 = init_params(k_params)
    params = prepare_actor_params(w1, b1, w2, b2)

    # Small batch (the original DDPG usage; state_dim = 4).
    state_small = jax.random.normal(k_small, (8, STATE_DIM), dtype=jnp.float32)
    action_small = jax.block_until_ready(actor_forward(state_small, params))
    ref_small = _reference_forward(state_small, w1, b1, w2, b2)
    assert action_small.shape == (8, N_OUT)
    assert jnp.allclose(action_small, ref_small, atol=2e-5, rtol=1e-5)

    # Ragged batch (not a multiple of 8 or of the tile) -> masked last block.
    state_rag = jax.random.normal(k_rag, (50, STATE_DIM), dtype=jnp.float32)
    action_rag = jax.block_until_ready(actor_forward(state_rag, params))
    ref_rag = _reference_forward(state_rag, w1, b1, w2, b2)
    assert action_rag.shape == (50, N_OUT)
    assert jnp.allclose(action_rag, ref_rag, atol=2e-5, rtol=1e-5)

    # Larger batch: >=2 tiles, exercises the batch-tiled grid.
    state_large = jax.random.normal(k_large, (1000, STATE_DIM), dtype=jnp.float32)
    action_large = jax.block_until_ready(actor_forward(state_large, params))
    ref_large = _reference_forward(state_large, w1, b1, w2, b2)
    assert action_large.shape == (1000, N_OUT)
    assert jnp.allclose(action_large, ref_large, atol=2e-5, rtol=1e-5)

    print("KERNEL_OK")
</pallas_src>

<mosaic_0001>
module attributes {stable_mosaic.version = 11 : i64} {
  func.func @_actor_kernel(%arg0: i32, %arg1: memref<8x4xf32, #tpu.memory_space<vmem>>, %arg2: memref<4x64xf32, #tpu.memory_space<vmem>>, %arg3: memref<1x64xf32, #tpu.memory_space<vmem>>, %arg4: memref<64x128xf32, #tpu.memory_space<vmem>>, %arg5: memref<1x128xf32, #tpu.memory_space<vmem>>, %arg6: memref<8x2xf32, #tpu.memory_space<vmem>>) attributes {dimension_semantics = [#tpu.dimension_semantics<parallel>], iteration_bounds = array<i64: 1>, scalar_prefetch = 0 : i64, scratch_operands = 0 : i64, tpu.core_type = #tpu.core_type<tc>, window_params = [{transform_indices = @transform_0, window_bounds = array<i64: 8, 4>}, {pipeline_mode = #tpu.pipeline_mode<synchronous>, transform_indices = @transform_1, window_bounds = array<i64: 4, 64>}, {pipeline_mode = #tpu.pipeline_mode<synchronous>, transform_indices = @transform_2, window_bounds = array<i64: 1, 64>}, {pipeline_mode = #tpu.pipeline_mode<synchronous>, transform_indices = @transform_3, window_bounds = array<i64: 64, 128>}, {pipeline_mode = #tpu.pipeline_mode<synchronous>, transform_indices = @transform_4, window_bounds = array<i64: 1, 128>}, {transform_indices = @transform_5, window_bounds = array<i64: 8, 2>}]} {
    %c0 = arith.constant 0 : index
    %c0_0 = arith.constant 0 : index
    %0 = vector.load %arg1[%c0, %c0_0] : memref<8x4xf32, #tpu.memory_space<vmem>>, vector<8x4xf32>
    %c0_1 = arith.constant 0 : index
    %c0_2 = arith.constant 0 : index
    %1 = vector.load %arg2[%c0_1, %c0_2] : memref<4x64xf32, #tpu.memory_space<vmem>>, vector<4x64xf32>
    %cst = arith.constant dense<0.000000e+00> : vector<8x64xf32>
    %2 = tpu.matmul %0, %1, %cst {dimension_numbers = #tpu.dot_dimension_numbers<[1], [0], [0], [1], [0, 0, 1, 1], [], []>, precision = #tpu.contract_precision<fp32>} : vector<8x4xf32>, vector<4x64xf32>, vector<8x64xf32> -> vector<8x64xf32>
    %c0_3 = arith.constant 0 : index
    %c0_4 = arith.constant 0 : index
    %3 = vector.load %arg3[%c0_3, %c0_4] : memref<1x64xf32, #tpu.memory_space<vmem>>, vector<1x64xf32>
    %4 = vector.broadcast %3 : vector<1x64xf32> to vector<8x64xf32>
    %5 = arith.addf %2, %4 : vector<8x64xf32>
    %cst_5 = arith.constant 2.000000e+01 : f32
    %6 = vector.broadcast %cst_5 : f32 to vector<8x64xf32>
    %7 = arith.cmpf ogt, %5, %6 : vector<8x64xf32>
    %cst_6 = arith.constant 2.000000e+01 : f32
    %8 = vector.broadcast %cst_6 : f32 to vector<8x64xf32>
    %9 = arith.minimumf %5, %8 : vector<8x64xf32>
    %10 = math.exp %9 : vector<8x64xf32>
    %11 = math.log1p %10 : vector<8x64xf32>
    %12 = arith.select %7, %5, %11 : vector<8x64xi1>, vector<8x64xf32>
    %c0_7 = arith.constant 0 : index
    %c0_8 = arith.constant 0 : index
    %13 = vector.load %arg4[%c0_7, %c0_8] : memref<64x128xf32, #tpu.memory_space<vmem>>, vector<64x128xf32>
    %cst_9 = arith.constant dense<0.000000e+00> : vector<8x128xf32>
    %14 = tpu.matmul %12, %13, %cst_9 {dimension_numbers = #tpu.dot_dimension_numbers<[1], [0], [0], [1], [0, 0, 1, 1], [], []>, precision = #tpu.contract_precision<fp32>} : vector<8x64xf32>, vector<64x128xf32>, vector<8x128xf32> -> vector<8x128xf32>
    %c0_10 = arith.constant 0 : index
    %c0_11 = arith.constant 0 : index
    %15 = vector.load %arg5[%c0_10, %c0_11] : memref<1x128xf32, #tpu.memory_space<vmem>>, vector<1x128xf32>
    %16 = vector.broadcast %15 : vector<1x128xf32> to vector<8x128xf32>
    %17 = arith.addf %14, %16 : vector<8x128xf32>
    %18 = vector.extract_strided_slice %17 {offsets = [0, 0], sizes = [8, 2], strides = [1, 1]} : vector<8x128xf32> to vector<8x2xf32>
    %19 = math.tanh %18 : vector<8x2xf32>
    %cst_12 = arith.constant 2.000000e+00 : f32
    %20 = vector.broadcast %cst_12 : f32 to vector<8x2xf32>
    %21 = arith.mulf %19, %20 : vector<8x2xf32>
    %c0_13 = arith.constant 0 : index
    %c0_14 = arith.constant 0 : index
    %22 = vector.load %arg6[%c0_13, %c0_14] : memref<8x2xf32, #tpu.memory_space<vmem>>, vector<8x2xf32>
    tpu.vector_store %arg6[%c0_13, %c0_14], %21 {strides = array<i32>} : memref<8x2xf32, #tpu.memory_space<vmem>>, vector<8x2xf32>,
    return
  }
  func.func @transform_0(%arg0: i32) -> (i32, i32) {
    %c0_i32 = arith.constant 0 : i32
    %c0_i32_0 = arith.constant 0 : i32
    return %arg0, %c0_i32 : i32, i32
  }
  func.func @transform_1(%arg0: i32) -> (i32, i32) {
    %c0_i32 = arith.constant 0 : i32
    %c0_i32_0 = arith.constant 0 : i32
    %c0_i32_1 = arith.constant 0 : i32
    return %c0_i32, %c0_i32_0 : i32, i32
  }
  func.func @transform_2(%arg0: i32) -> (i32, i32) {
    %c0_i32 = arith.constant 0 : i32
    %c0_i32_0 = arith.constant 0 : i32
    %c0_i32_1 = arith.constant 0 : i32
    return %c0_i32, %c0_i32_0 : i32, i32
  }
  func.func @transform_3(%arg0: i32) -> (i32, i32) {
    %c0_i32 = arith.constant 0 : i32
    %c0_i32_0 = arith.constant 0 : i32
    %c0_i32_1 = arith.constant 0 : i32
    return %c0_i32, %c0_i32_0 : i32, i32
  }
  func.func @transform_4(%arg0: i32) -> (i32, i32) {
    %c0_i32 = arith.constant 0 : i32
    %c0_i32_0 = arith.constant 0 : i32
    %c0_i32_1 = arith.constant 0 : i32
    return %c0_i32, %c0_i32_0 : i32, i32
  }
  func.func @transform_5(%arg0: i32) -> (i32, i32) {
    %c0_i32 = arith.constant 0 : i32
    %c0_i32_0 = arith.constant 0 : i32
    return %arg0, %c0_i32 : i32, i32
  }
}

</mosaic_0001>

<llo_original>
// kernel: tpu_custom_call.1
$region0: #{tpu_custom_call.1}
  #allocation0 [shape = 'u32[]', space=smem, size = 0x4, offset = 0x4, fixed_abs, tag = 'smem constant byte address 0x4 - core index']
  #allocation1 [shape = 'u32[144,128]{1,0:T(1,128)}', space=vmem, size = 0x12000, scoped, tag = 'internal scratch']
  %s0 = inlined_call_operand.vmem [shape: f32[8,4], index: 0, kind: input, shape index: {}]
  %s1 = inlined_call_operand.vmem [shape: f32[4,64], index: 1, kind: input, shape index: {}]
  %s2 = inlined_call_operand.vmem [shape: f32[1,64], index: 2, kind: input, shape index: {}]
  %s3 = inlined_call_operand.hbm [shape: f32[64,128], index: 3, kind: input, shape index: {}]
  %s4 = inlined_call_operand.vmem [shape: f32[1,128], index: 4, kind: input, shape index: {}]
  %s5 = inlined_call_operand.vmem [shape: f32[8,2], index: 5, kind: output, shape index: {}]
  %s6 = sld [smem:[#allocation0]]
  $region34: #{tpu_custom_call.1} parent=0
    _
  %s8 = ssub.s32 1, %s6
  %s9 = scalar_select 0, %s8, %s6
  $region1: #{tpu_custom_call.1} parent=0
    #allocation2 [shape = 'u8[32768]{0}', space=vmem, size = 0x8000, scoped, tag = 'input window, operand 3, single buffered']
    #allocation3 [shape = 's32[1]{0}', space=sflag, size = 0x4, scoped, tag = 'scoped memory for tpu_custom_call.1']
    %10 = vsyncpa [#allocation3], 0
    // Predicated region
    $region2: #{tpu_custom_call.1} parent=1 // pred_check
      _
    $region3: #{tpu_custom_call.1} parent=1 // pred_check_branch
      %12 = sbr.rel (0) target = $region5
    $region4: #{tpu_custom_call.1} parent=1 // pred_region
      _
    $region5: #{tpu_custom_call.1} parent=1 // pred_fallthru
      _
    // Predicated region
    $region6: #{tpu_custom_call.1} parent=1 // pred_check
      _
    $region7: #{tpu_custom_call.1} parent=1 // pred_check_branch
      %14 = sbr.rel (0) target = $region9
    $region8: #{tpu_custom_call.1} parent=1 // pred_region
      _
    $region9: #{tpu_custom_call.1} parent=1 // pred_fallthru
      _
    // Predicated region
    $region10: #{tpu_custom_call.1} parent=1 // pred_check
      _
    $region11: #{tpu_custom_call.1} parent=1 // pred_check_branch
      %16 = sbr.rel (0) target = $region13
    $region12: #{tpu_custom_call.1} parent=1 // pred_region
      _
    $region13: #{tpu_custom_call.1} parent=1 // pred_fallthru
      _
    // Predicated region
    $region14: #{tpu_custom_call.1} parent=1 // pred_check
      _
    $region15: #{tpu_custom_call.1} parent=1 // pred_check_branch
      %18 = sbr.rel (0) target = $region17
    $region16: #{tpu_custom_call.1} parent=1 // pred_region
      %s20 = ssub.s32 1024, 1024
      %21 = vsyncadd [#allocation3], %s20
      %s22 = sshll.u32 [#allocation2], 4
      %s23 = int_to_ptr.vmem [resolvable:$true] %s22
      %28 = dma.hbm_to_vmem [thread:$0]  %s3, 1024, %s23, [#allocation3], 128, 128, 8
    $region17: #{tpu_custom_call.1} parent=1 // pred_fallthru
      _
    // Predicated region
    $region18: #{tpu_custom_call.1} parent=1 // pred_check
      _
    $region19: #{tpu_custom_call.1} parent=1 // pred_check_branch
      %30 = sbr.rel (0) target = $region21
    $region20: #{tpu_custom_call.1} parent=1 // pred_region
      _
    $region21: #{tpu_custom_call.1} parent=1 // pred_fallthru
      _
    // Predicated region
    $region22: #{tpu_custom_call.1} parent=1 // pred_check
      _
    $region23: #{tpu_custom_call.1} parent=1 // pred_check_branch
      %32 = sbr.rel (0) target = $region25
    $region24: #{tpu_custom_call.1} parent=1 // pred_region
      %33 = dma.done [#allocation3], 1024
    $region25: #{tpu_custom_call.1} parent=1 // pred_fallthru
      _
    %v34 = vld [vmem:[%s0] sm:$0xff]
    %v35 = vld [vmem:[%s1] sm:$0xf]
    %v36 = vld [vmem:[%s2] sm:$0x1]
    %v38 = vlaneseq
    %v39 = vshrl.u32 %v38, 7
    %v40 = vsub.s32 0, %v39
    %v41 = vrot.slane %v36, %v40
    %vm43 = vcmask 31744
    %v45 = vsel %vm43, %v34, 0
    %vm47 = vcmask 1043456
    %v49 = vsel %vm47, %v35, 0
    %51 = vmatprep.subr.mxu0 0.0
    %52 = vmatpush1.msra.mxu0 0.0
    %53 = vmatprep.subr.mxu0 0.0
    %54 = vmatpush1.msra.mxu0 0.0
    %55 = vmatprep.subr.mxu0 0.0
    %56 = vmatpush1.msra.mxu0 0.0
    %57 = vmatprep.subr.mxu0 0.0
    %58 = vmatpush1.msra.mxu0 0.0
    %59 = vmatprep.subr.mxu0 0.0
    %60 = vmatpush1.msra.mxu0 0.0
    %61 = vmatprep.subr.mxu0 0.0
    %62 = vmatpush1.msra.mxu0 0.0
    %63 = vmatprep.subr.mxu0 0.0
    %64 = vmatpush1.msra.mxu0 0.0
    %65 = vmatprep.subr.mxu0 0.0
    %66 = vmatpush1.msra.mxu0 0.0
    %67 = vmatprep.subr.mxu0 0.0
    %68 = vmatpush1.msra.mxu0 0.0
    %69 = vmatprep.subr.mxu0 0.0
    %70 = vmatpush1.msra.mxu0 0.0
    %71 = vmatprep.subr.mxu0 0.0
    %72 = vmatpush1.msra.mxu0 0.0
    %73 = vmatprep.subr.mxu0 0.0
    %74 = vmatpush1.msra.mxu0 0.0
    %75 = vmatprep.subr.mxu0 0.0
    %76 = vmatpush1.msra.mxu0 0.0
    %77 = vmatprep.subr.mxu0 0.0
    %78 = vmatpush1.msra.mxu0 0.0
    %79 = vmatprep.subr.mxu0 0.0
    %80 = vmatpush1.msra.mxu0 0.0
    %81 = vmatprep.subr.mxu0 0.0
    %v82 = vand.u32 %v49, 4294901760
    %83 = vmatpush1.msra.mxu0 %v82
    %84 = vmatprep.subr.mxu0 0.0
    %85 = vmatpush2.msra.mxu0 0.0
    %86 = vmatprep.subr.mxu0 0.0
    %87 = vmatpush2.msra.mxu0 0.0
    %88 = vmatprep.subr.mxu0 0.0
    %89 = vmatpush2.msra.mxu0 0.0
    %90 = vmatprep.subr.mxu0 0.0
    %91 = vmatpush2.msra.mxu0 0.0
    %92 = vmatprep.subr.mxu0 0.0
    %93 = vmatpush2.msra.mxu0 0.0
    %94 = vmatprep.subr.mxu0 0.0
    %95 = vmatpush2.msra.mxu0 0.0
    %96 = vmatprep.subr.mxu0 0.0
    %97 = vmatpush2.msra.mxu0 0.0
    %98 = vmatprep.subr.mxu0 0.0
    %99 = vmatpush2.msra.mxu0 0.0
    %100 = vmatprep.subr.mxu0 0.0
    %101 = vmatpush2.msra.mxu0 0.0
    %102 = vmatprep.subr.mxu0 0.0
    %103 = vmatpush2.msra.mxu0 0.0
    %104 = vmatprep.subr.mxu0 0.0
    %105 = vmatpush2.msra.mxu0 0.0
    %106 = vmatprep.subr.mxu0 0.0
    %107 = vmatpush2.msra.mxu0 0.0
    %108 = vmatprep.subr.mxu0 0.0
    %109 = vmatpush2.msra.mxu0 0.0
    %110 = vmatprep.subr.mxu0 0.0
    %111 = vmatpush2.msra.mxu0 0.0
    %112 = vmatprep.subr.mxu0 0.0
    %113 = vmatpush2.msra.mxu0 0.0
    %114 = vmatprep.subr.mxu0 0.0
    %115 = vmatpush2.msra.mxu0 0.0
    %116 = vmatprep.mubr.f32.mxu0 0.0
    %v117 = vand.u32 %v45, 4294901760
    %v118 = vsub.f32 %v45, %v117
    %v119 = vand.u32 %v118, 4294901760
    %v120 = vsub.f32 %v118, %v119
    %v121 = vand.u32 %v120, 4294901760
    %122 = vmatmul.mubr.f32.gmra.mxu0 %v121
    %v123 = vpop.f32.mrf.mxu0
    %v124 = vadd.f32 %v41, %v123
    %v125 = vpop.f32.mrf.mxu0
    %126 = vdwg.mxu0
    %127 = vmatprep.subr.mxu0 0.0
    %128 = vmatpush1.msra.mxu0 0.0
    %129 = vmatprep.subr.mxu0 0.0
    %130 = vmatpush1.msra.mxu0 0.0
    %131 = vmatprep.subr.mxu0 0.0
    %132 = vmatpush1.msra.mxu0 0.0
    %133 = vmatprep.subr.mxu0 0.0
    %134 = vmatpush1.msra.mxu0 0.0
    %135 = vmatprep.subr.mxu0 0.0
    %136 = vmatpush1.msra.mxu0 0.0
    %137 = vmatprep.subr.mxu0 0.0
    %138 = vmatpush1.msra.mxu0 0.0
    %139 = vmatprep.subr.mxu0 0.0
    %140 = vmatpush1.msra.mxu0 0.0
    %141 = vmatprep.subr.mxu0 0.0
    %142 = vmatpush1.msra.mxu0 0.0
    %143 = vmatprep.subr.mxu0 0.0
    %144 = vmatpush1.msra.mxu0 0.0
    %145 = vmatprep.subr.mxu0 0.0
    %146 = vmatpush1.msra.mxu0 0.0
    %147 = vmatprep.subr.mxu0 0.0
    %148 = vmatpush1.msra.mxu0 0.0
    %149 = vmatprep.subr.mxu0 0.0
    %150 = vmatpush1.msra.mxu0 0.0
    %151 = vmatprep.subr.mxu0 0.0
    %152 = vmatpush1.msra.mxu0 0.0
    %153 = vmatprep.subr.mxu0 0.0
    %154 = vmatpush1.msra.mxu0 0.0
    %155 = vmatprep.subr.mxu0 0.0
    %156 = vmatpush1.msra.mxu0 0.0
    %157 = vmatprep.subr.mxu0 0.0
    %v158 = vand.u32 %v49, 4294901760
    %v159 = vsub.f32 %v49, %v158
    %v160 = vand.u32 %v159, 4294901760
    %v161 = vsub.f32 %v159, %v160
    %v162 = vand.u32 %v161, 4294901760
    %163 = vmatpush1.msra.mxu0 %v162
    %164 = vmatprep.subr.mxu0 0.0
    %165 = vmatpush2.msra.mxu0 0.0
    %166 = vmatprep.subr.mxu0 0.0
    %167 = vmatpush2.msra.mxu0 0.0
    %168 = vmatprep.subr.mxu0 0.0
    %169 = vmatpush2.msra.mxu0 0.0
    %170 = vmatprep.subr.mxu0 0.0
    %171 = vmatpush2.msra.mxu0 0.0
    %172 = vmatprep.subr.mxu0 0.0
    %173 = vmatpush2.msra.mxu0 0.0
    %174 = vmatprep.subr.mxu0 0.0
    %175 = vmatpush2.msra.mxu0 0.0
    %176 = vmatprep.subr.mxu0 0.0
    %177 = vmatpush2.msra.mxu0 0.0
    %178 = vmatprep.subr.mxu0 0.0
    %179 = vmatpush2.msra.mxu0 0.0
    %180 = vmatprep.subr.mxu0 0.0
    %181 = vmatpush2.msra.mxu0 0.0
    %182 = vmatprep.subr.mxu0 0.0
    %183 = vmatpush2.msra.mxu0 0.0
    %184 = vmatprep.subr.mxu0 0.0
    %185 = vmatpush2.msra.mxu0 0.0
    %186 = vmatprep.subr.mxu0 0.0
    %187 = vmatpush2.msra.mxu0 0.0
    %188 = vmatprep.subr.mxu0 0.0
    %189 = vmatpush2.msra.mxu0 0.0
    %190 = vmatprep.subr.mxu0 0.0
    %191 = vmatpush2.msra.mxu0 0.0
    %192 = vmatprep.subr.mxu0 0.0
    %193 = vmatpush2.msra.mxu0 0.0
    %194 = vmatprep.subr.mxu0 0.0
    %195 = vmatpush2.msra.mxu0 0.0
    %196 = vmatprep.mubr.f32.mxu0 0.0
    %v197 = vand.u32 %v45, 4294901760
    %198 = vmatmul.mubr.f32.gmra.mxu0 %v197
    %v199 = vpop.f32.mrf.mxu0
    %v200 = vadd.f32 %v124, %v199
    %v201 = vpop.f32.mrf.mxu0
    %202 = vdwg.mxu0
    %203 = vmatprep.subr.mxu0 0.0
    %204 = vmatpush1.msra.mxu0 0.0
    %205 = vmatprep.subr.mxu0 0.0
    %206 = vmatpush1.msra.mxu0 0.0
    %207 = vmatprep.subr.mxu0 0.0
    %208 = vmatpush1.msra.mxu0 0.0
    %209 = vmatprep.subr.mxu0 0.0
    %210 = vmatpush1.msra.mxu0 0.0
    %211 = vmatprep.subr.mxu0 0.0
    %212 = vmatpush1.msra.mxu0 0.0
    %213 = vmatprep.subr.mxu0 0.0
    %214 = vmatpush1.msra.mxu0 0.0
    %215 = vmatprep.subr.mxu0 0.0
    %216 = vmatpush1.msra.mxu0 0.0
    %217 = vmatprep.subr.mxu0 0.0
    %218 = vmatpush1.msra.mxu0 0.0
    %219 = vmatprep.subr.mxu0 0.0
    %220 = vmatpush1.msra.mxu0 0.0
    %221 = vmatprep.subr.mxu0 0.0
    %222 = vmatpush1.msra.mxu0 0.0
    %223 = vmatprep.subr.mxu0 0.0
    %224 = vmatpush1.msra.mxu0 0.0
    %225 = vmatprep.subr.mxu0 0.0
    %226 = vmatpush1.msra.mxu0 0.0
    %227 = vmatprep.subr.mxu0 0.0
    %228 = vmatpush1.msra.mxu0 0.0
    %229 = vmatprep.subr.mxu0 0.0
    %230 = vmatpush1.msra.mxu0 0.0
    %231 = vmatprep.subr.mxu0 0.0
    %232 = vmatpush1.msra.mxu0 0.0
    %233 = vmatprep.subr.mxu0 0.0
    %v234 = vand.u32 %v49, 4294901760
    %v235 = vsub.f32 %v49, %v234
    %236 = vmatpush1.msra.mxu0 %v235
    %237 = vmatprep.subr.mxu0 0.0
    %238 = vmatpush2.msra.mxu0 0.0
    %239 = vmatprep.subr.mxu0 0.0
    %240 = vmatpush2.msra.mxu0 0.0
    %241 = vmatprep.subr.mxu0 0.0
    %242 = vmatpush2.msra.mxu0 0.0
    %243 = vmatprep.subr.mxu0 0.0
    %244 = vmatpush2.msra.mxu0 0.0
    %245 = vmatprep.subr.mxu0 0.0
    %246 = vmatpush2.msra.mxu0 0.0
    %247 = vmatprep.subr.mxu0 0.0
    %248 = vmatpush2.msra.mxu0 0.0
    %249 = vmatprep.subr.mxu0 0.0
    %250 = vmatpush2.msra.mxu0 0.0
    %251 = vmatprep.subr.mxu0 0.0
    %252 = vmatpush2.msra.mxu0 0.0
    %253 = vmatprep.subr.mxu0 0.0
    %254 = vmatpush2.msra.mxu0 0.0
    %255 = vmatprep.subr.mxu0 0.0
    %256 = vmatpush2.msra.mxu0 0.0
    %257 = vmatprep.subr.mxu0 0.0
    %258 = vmatpush2.msra.mxu0 0.0
    %259 = vmatprep.subr.mxu0 0.0
    %260 = vmatpush2.msra.mxu0 0.0
    %261 = vmatprep.subr.mxu0 0.0
    %262 = vmatpush2.msra.mxu0 0.0
    %263 = vmatprep.subr.mxu0 0.0
    %264 = vmatpush2.msra.mxu0 0.0
    %265 = vmatprep.subr.mxu0 0.0
    %266 = vmatpush2.msra.mxu0 0.0
    %267 = vmatprep.subr.mxu0 0.0
    %268 = vmatpush2.msra.mxu0 0.0
    %269 = vmatprep.mubr.f32.mxu0 0.0
    %v270 = vand.u32 %v45, 4294901760
    %v271 = vsub.f32 %v45, %v270
    %272 = vmatmul.mubr.f32.gmra.mxu0 %v271
    %v273 = vpop.f32.mrf.mxu0
    %v274 = vadd.f32 %v200, %v273
    %v275 = vpop.f32.mrf.mxu0
    %276 = vdwg.mxu0
    %277 = vmatprep.subr.mxu0 0.0
    %278 = vmatpush1.msra.mxu0 0.0
    %279 = vmatprep.subr.mxu0 0.0
    %280 = vmatpush1.msra.mxu0 0.0
    %281 = vmatprep.subr.mxu0 0.0
    %282 = vmatpush1.msra.mxu0 0.0
    %283 = vmatprep.subr.mxu0 0.0
    %284 = vmatpush1.msra.mxu0 0.0
    %285 = vmatprep.subr.mxu0 0.0
    %286 = vmatpush1.msra.mxu0 0.0
    %287 = vmatprep.subr.mxu0 0.0
    %288 = vmatpush1.msra.mxu0 0.0
    %289 = vmatprep.subr.mxu0 0.0
    %290 = vmatpush1.msra.mxu0 0.0
    %291 = vmatprep.subr.mxu0 0.0
    %292 = vmatpush1.msra.mxu0 0.0
    %293 = vmatprep.subr.mxu0 0.0
    %294 = vmatpush1.msra.mxu0 0.0
    %295 = vmatprep.subr.mxu0 0.0
    %296 = vmatpush1.msra.mxu0 0.0
    %297 = vmatprep.subr.mxu0 0.0
    %298 = vmatpush1.msra.mxu0 0.0
    %299 = vmatprep.subr.mxu0 0.0
    %300 = vmatpush1.msra.mxu0 0.0
    %301 = vmatprep.subr.mxu0 0.0
    %302 = vmatpush1.msra.mxu0 0.0
    %303 = vmatprep.subr.mxu0 0.0
    %304 = vmatpush1.msra.mxu0 0.0
    %305 = vmatprep.subr.mxu0 0.0
    %306 = vmatpush1.msra.mxu0 0.0
    %307 = vmatprep.subr.mxu0 0.0
    %v308 = vand.u32 %v49, 4294901760
    %309 = vmatpush1.msra.mxu0 %v308
    %310 = vmatprep.subr.mxu0 0.0
    %311 = vmatpush2.msra.mxu0 0.0
    %312 = vmatprep.subr.mxu0 0.0
    %313 = vmatpush2.msra.mxu0 0.0
    %314 = vmatprep.subr.mxu0 0.0
    %315 = vmatpush2.msra.mxu0 0.0
    %316 = vmatprep.subr.mxu0 0.0
    %317 = vmatpush2.msra.mxu0 0.0
    %318 = vmatprep.subr.mxu0 0.0
    %319 = vmatpush2.msra.mxu0 0.0
    %320 = vmatprep.subr.mxu0 0.0
    %321 = vmatpush2.msra.mxu0 0.0
    %322 = vmatprep.subr.mxu0 0.0
    %323 = vmatpush2.msra.mxu0 0.0
    %324 = vmatprep.subr.mxu0 0.0
    %325 = vmatpush2.msra.mxu0 0.0
    %326 = vmatprep.subr.mxu0 0.0
    %327 = vmatpush2.msra.mxu0 0.0
    %328 = vmatprep.subr.mxu0 0.0
    %329 = vmatpush2.msra.mxu0 0.0
    %330 = vmatprep.subr.mxu0 0.0
    %331 = vmatpush2.msra.mxu0 0.0
    %332 = vmatprep.subr.mxu0 0.0
    %333 = vmatpush2.msra.mxu0 0.0
    %334 = vmatprep.subr.mxu0 0.0
    %335 = vmatpush2.msra.mxu0 0.0
    %336 = vmatprep.subr.mxu0 0.0
    %337 = vmatpush2.msra.mxu0 0.0
    %338 = vmatprep.subr.mxu0 0.0
    %339 = vmatpush2.msra.mxu0 0.0
    %340 = vmatprep.subr.mxu0 0.0
    %341 = vmatpush2.msra.mxu0 0.0
    %342 = vmatprep.mubr.f32.mxu0 0.0
    %v343 = vand.u32 %v45, 4294901760
    %v344 = vsub.f32 %v45, %v343
    %v345 = vand.u32 %v344, 4294901760
    %346 = vmatmul.mubr.f32.gmra.mxu0 %v345
    %v347 = vpop.f32.mrf.mxu0
    %v348 = vadd.f32 %v274, %v347
    %v349 = vpop.f32.mrf.mxu0
    %350 = vdwg.mxu0
    %351 = vmatprep.subr.mxu0 0.0
    %352 = vmatpush1.msra.mxu0 0.0
    %353 = vmatprep.subr.mxu0 0.0
    %354 = vmatpush1.msra.mxu0 0.0
    %355 = vmatprep.subr.mxu0 0.0
    %356 = vmatpush1.msra.mxu0 0.0
    %357 = vmatprep.subr.mxu0 0.0
    %358 = vmatpush1.msra.mxu0 0.0
    %359 = vmatprep.subr.mxu0 0.0
    %360 = vmatpush1.msra.mxu0 0.0
    %361 = vmatprep.subr.mxu0 0.0
    %362 = vmatpush1.msra.mxu0 0.0
    %363 = vmatprep.subr.mxu0 0.0
    %364 = vmatpush1.msra.mxu0 0.0
    %365 = vmatprep.subr.mxu0 0.0
    %366 = vmatpush1.msra.mxu0 0.0
    %367 = vmatprep.subr.mxu0 0.0
    %368 = vmatpush1.msra.mxu0 0.0
    %369 = vmatprep.subr.mxu0 0.0
    %370 = vmatpush1.msra.mxu0 0.0
    %371 = vmatprep.subr.mxu0 0.0
    %372 = vmatpush1.msra.mxu0 0.0
    %373 = vmatprep.subr.mxu0 0.0
    %374 = vmatpush1.msra.mxu0 0.0
    %375 = vmatprep.subr.mxu0 0.0
    %376 = vmatpush1.msra.mxu0 0.0
    %377 = vmatprep.subr.mxu0 0.0
    %378 = vmatpush1.msra.mxu0 0.0
    %379 = vmatprep.subr.mxu0 0.0
    %380 = vmatpush1.msra.mxu0 0.0
    %381 = vmatprep.subr.mxu0 0.0
    %v382 = vand.u32 %v49, 4294901760
    %v383 = vsub.f32 %v49, %v382
    %v384 = vand.u32 %v383, 4294901760
    %385 = vmatpush1.msra.mxu0 %v384
    %386 = vmatprep.subr.mxu0 0.0
    %387 = vmatpush2.msra.mxu0 0.0
    %388 = vmatprep.subr.mxu0 0.0
    %389 = vmatpush2.msra.mxu0 0.0
    %390 = vmatprep.subr.mxu0 0.0
    %391 = vmatpush2.msra.mxu0 0.0
    %392 = vmatprep.subr.mxu0 0.0
    %393 = vmatpush2.msra.mxu0 0.0
    %394 = vmatprep.subr.mxu0 0.0
    %395 = vmatpush2.msra.mxu0 0.0
    %396 = vmatprep.subr.mxu0 0.0
    %397 = vmatpush2.msra.mxu0 0.0
    %398 = vmatprep.subr.mxu0 0.0
    %399 = vmatpush2.msra.mxu0 0.0
    %400 = vmatprep.subr.mxu0 0.0
    %401 = vmatpush2.msra.mxu0 0.0
    %402 = vmatprep.subr.mxu0 0.0
    %403 = vmatpush2.msra.mxu0 0.0
    %404 = vmatprep.subr.mxu0 0.0
    %405 = vmatpush2.msra.mxu0 0.0
    %406 = vmatprep.subr.mxu0 0.0
    %407 = vmatpush2.msra.mxu0 0.0
    %408 = vmatprep.subr.mxu0 0.0
    %409 = vmatpush2.msra.mxu0 0.0
    %410 = vmatprep.subr.mxu0 0.0
    %411 = vmatpush2.msra.mxu0 0.0
    %412 = vmatprep.subr.mxu0 0.0
    %413 = vmatpush2.msra.mxu0 0.0
    %414 = vmatprep.subr.mxu0 0.0
    %415 = vmatpush2.msra.mxu0 0.0
    %416 = vmatprep.subr.mxu0 0.0
    %417 = vmatpush2.msra.mxu0 0.0
    %418 = vmatprep.mubr.f32.mxu0 0.0
    %v419 = vand.u32 %v45, 4294901760
    %420 = vmatmul.mubr.f32.gmra.mxu0 %v419
    %v421 = vpop.f32.mrf.mxu0
    %v422 = vadd.f32 %v348, %v421
    %v423 = vpop.f32.mrf.mxu0
    %424 = vdwg.mxu0
    %425 = vmatprep.subr.mxu0 0.0
    %426 = vmatpush1.msra.mxu0 0.0
    %427 = vmatprep.subr.mxu0 0.0
    %428 = vmatpush1.msra.mxu0 0.0
    %429 = vmatprep.subr.mxu0 0.0
    %430 = vmatpush1.msra.mxu0 0.0
    %431 = vmatprep.subr.mxu0 0.0
    %432 = vmatpush1.msra.mxu0 0.0
    %433 = vmatprep.subr.mxu0 0.0
    %434 = vmatpush1.msra.mxu0 0.0
    %435 = vmatprep.subr.mxu0 0.0
    %436 = vmatpush1.msra.mxu0 0.0
    %437 = vmatprep.subr.mxu0 0.0
    %438 = vmatpush1.msra.mxu0 0.0
    %439 = vmatprep.subr.mxu0 0.0
    %440 = vmatpush1.msra.mxu0 0.0
    %441 = vmatprep.subr.mxu0 0.0
    %442 = vmatpush1.msra.mxu0 0.0
    %443 = vmatprep.subr.mxu0 0.0
    %444 = vmatpush1.msra.mxu0 0.0
    %445 = vmatprep.subr.mxu0 0.0
    %446 = vmatpush1.msra.mxu0 0.0
    %447 = vmatprep.subr.mxu0 0.0
    %448 = vmatpush1.msra.mxu0 0.0
    %449 = vmatprep.subr.mxu0 0.0
    %450 = vmatpush1.msra.mxu0 0.0
    %451 = vmatprep.subr.mxu0 0.0
    %452 = vmatpush1.msra.mxu0 0.0
    %453 = vmatprep.subr.mxu0 0.0
    %454 = vmatpush1.msra.mxu0 0.0
    %455 = vmatprep.subr.mxu0 0.0
    %v456 = vand.u32 %v49, 4294901760
    %457 = vmatpush1.msra.mxu0 %v456
    %458 = vmatprep.subr.mxu0 0.0
    %459 = vmatpush2.msra.mxu0 0.0
    %460 = vmatprep.subr.mxu0 0.0
    %461 = vmatpush2.msra.mxu0 0.0
    %462 = vmatprep.subr.mxu0 0.0
    %463 = vmatpush2.msra.mxu0 0.0
    %464 = vmatprep.subr.mxu0 0.0
    %465 = vmatpush2.msra.mxu0 0.0
    %466 = vmatprep.subr.mxu0 0.0
    %467 = vmatpush2.msra.mxu0 0.0
    %468 = vmatprep.subr.mxu0 0.0
    %469 = vmatpush2.msra.mxu0 0.0
    %470 = vmatprep.subr.mxu0 0.0
    %471 = vmatpush2.msra.mxu0 0.0
    %472 = vmatprep.subr.mxu0 0.0
    %473 = vmatpush2.msra.mxu0 0.0
    %474 = vmatprep.subr.mxu0 0.0
    %475 = vmatpush2.msra.mxu0 0.0
    %476 = vmatprep.subr.mxu0 0.0
    %477 = vmatpush2.msra.mxu0 0.0
    %478 = vmatprep.subr.mxu0 0.0
    %479 = vmatpush2.msra.mxu0 0.0
    %480 = vmatprep.subr.mxu0 0.0
    %481 = vmatpush2.msra.mxu0 0.0
    %482 = vmatprep.subr.mxu0 0.0
    %483 = vmatpush2.msra.mxu0 0.0
    %484 = vmatprep.subr.mxu0 0.0
    %485 = vmatpush2.msra.mxu0 0.0
    %486 = vmatprep.subr.mxu0 0.0
    %487 = vmatpush2.msra.mxu0 0.0
    %488 = vmatprep.subr.mxu0 0.0
    %489 = vmatpush2.msra.mxu0 0.0
    %490 = vmatprep.mubr.f32.mxu0 0.0
    %v491 = vand.u32 %v45, 4294901760
    %492 = vmatmul.mubr.f32.gmra.mxu0 %v491
    %v493 = vpop.f32.mrf.mxu0
    %v494 = vadd.f32 %v422, %v493
    %v495 = vpop.f32.mrf.mxu0
    %496 = vdwg.mxu0
    %vm497 = vcmp.gt.f32.partialorder %v494, 20.0
    %v498 = vmin.f32 %v494, 20.0
    %v499 = vmul.f32 %v498, 1.442695
    %v500 = vpow.pop %v499
    %v501 = vadd.f32 %v500, 1.0
    %v502 = vlog2.pop %v501
    %v503 = vmul.f32 %v502, 0.6931472
    %v504 = vmul.f32 -0.5, %v500
    %v505 = vadd.f32 %v504, 1.0
    %v506 = vmul.f32 %v505, %v500
    %v507 = vand.u32 2147483647, %v500
    %vm508 = vcmp.lt.f32.partialorder %v507, 0.0004427343
    %v509 = vsel %vm508, %v506, %v503
    %v510 = vsel %vm497, %v494, %v509
    %v511 = vld [vmem:[#allocation2] sm:$0xff]
    %v512 = vld [vmem:[#allocation2 + $0x8] sm:$0xff]
    %v513 = vld [vmem:[#allocation2 + $0x10] sm:$0xff]
    %v514 = vld [vmem:[#allocation2 + $0x18] sm:$0xff]
    %v515 = vld [vmem:[#allocation2 + $0x20] sm:$0xff]
    %v516 = vld [vmem:[#allocation2 + $0x28] sm:$0xff]
    %v517 = vld [vmem:[#allocation2 + $0x30] sm:$0xff]
    %v518 = vld [vmem:[#allocation2 + $0x38] sm:$0xff]
    %v519 = vld [vmem:[%s4] sm:$0x1]
    %v521 = vlaneseq
    %v522 = vshrl.u32 %v521, 7
    %v523 = vsub.s32 0, %v522
    %v524 = vrot.slane %v519, %v523
    %vm526 = vcmask 523264
    %v528 = vsel %vm526, %v510, 0
    %530 = vmatprep.subr.mxu0 0.0
    %531 = vmatpush1.msra.mxu0 0.0
    %532 = vmatprep.subr.mxu0 0.0
    %533 = vmatpush1.msra.mxu0 0.0
    %534 = vmatprep.subr.mxu0 0.0
    %535 = vmatpush1.msra.mxu0 0.0
    %536 = vmatprep.subr.mxu0 0.0
    %537 = vmatpush1.msra.mxu0 0.0
    %538 = vmatprep.subr.mxu0 0.0
    %539 = vmatpush1.msra.mxu0 0.0
    %540 = vmatprep.subr.mxu0 0.0
    %541 = vmatpush1.msra.mxu0 0.0
    %542 = vmatprep.subr.mxu0 0.0
    %543 = vmatpush1.msra.mxu0 0.0
    %544 = vmatprep.subr.mxu0 0.0
    %545 = vmatpush1.msra.mxu0 0.0
    %546 = vmatprep.subr.mxu0 0.0
    %v547 = vand.u32 %v518, 4294901760
    %548 = vmatpush1.msra.mxu0 %v547
    %549 = vmatprep.subr.mxu0 0.0
    %v550 = vand.u32 %v517, 4294901760
    %551 = vmatpush1.msra.mxu0 %v550
    %552 = vmatprep.subr.mxu0 0.0
    %v553 = vand.u32 %v516, 4294901760
    %554 = vmatpush1.msra.mxu0 %v553
    %555 = vmatprep.subr.mxu0 0.0
    %v556 = vand.u32 %v515, 4294901760
    %557 = vmatpush1.msra.mxu0 %v556
    %558 = vmatprep.subr.mxu0 0.0
    %v559 = vand.u32 %v514, 4294901760
    %560 = vmatpush1.msra.mxu0 %v559
    %561 = vmatprep.subr.mxu0 0.0
    %v562 = vand.u32 %v513, 4294901760
    %563 = vmatpush1.msra.mxu0 %v562
    %564 = vmatprep.subr.mxu0 0.0
    %v565 = vand.u32 %v512, 4294901760
    %566 = vmatpush1.msra.mxu0 %v565
    %567 = vmatprep.subr.mxu0 0.0
    %v568 = vand.u32 %v511, 4294901760
    %569 = vmatpush1.msra.mxu0 %v568
    %570 = vmatprep.subr.mxu0 0.0
    %571 = vmatpush2.msra.mxu0 0.0
    %572 = vmatprep.subr.mxu0 0.0
    %573 = vmatpush2.msra.mxu0 0.0
    %574 = vmatprep.subr.mxu0 0.0
    %575 = vmatpush2.msra.mxu0 0.0
    %576 = vmatprep.subr.mxu0 0.0
    %577 = vmatpush2.msra.mxu0 0.0
    %578 = vmatprep.subr.mxu0 0.0
    %579 = vmatpush2.msra.mxu0 0.0
    %580 = vmatprep.subr.mxu0 0.0
    %581 = vmatpush2.msra.mxu0 0.0
    %582 = vmatprep.subr.mxu0 0.0
    %583 = vmatpush2.msra.mxu0 0.0
    %584 = vmatprep.subr.mxu0 0.0
    %585 = vmatpush2.msra.mxu0 0.0
    %586 = vmatprep.subr.mxu0 0.0
    %587 = vmatpush2.msra.mxu0 0.0
    %588 = vmatprep.subr.mxu0 0.0
    %589 = vmatpush2.msra.mxu0 0.0
    %590 = vmatprep.subr.mxu0 0.0
    %591 = vmatpush2.msra.mxu0 0.0
    %592 = vmatprep.subr.mxu0 0.0
    %593 = vmatpush2.msra.mxu0 0.0
    %594 = vmatprep.subr.mxu0 0.0
    %595 = vmatpush2.msra.mxu0 0.0
    %596 = vmatprep.subr.mxu0 0.0
    %597 = vmatpush2.msra.mxu0 0.0
    %598 = vmatprep.subr.mxu0 0.0
    %599 = vmatpush2.msra.mxu0 0.0
    %600 = vmatprep.subr.mxu0 0.0
    %601 = vmatpush2.msra.mxu0 0.0
    %602 = vmatprep.mubr.f32.mxu0 0.0
    %v603 = vand.u32 %v528, 4294901760
    %v604 = vsub.f32 %v528, %v603
    %v605 = vand.u32 %v604, 4294901760
    %v606 = vsub.f32 %v604, %v605
    %v607 = vand.u32 %v606, 4294901760
    %608 = vmatmul.mubr.f32.gmra.mxu0 %v607
    %v609 = vpop.f32.mrf.mxu0
    %v610 = vadd.f32 %v524, %v609
    %v611 = vpop.f32.mrf.mxu0
    %612 = vdwg.mxu0
    %613 = vmatprep.subr.mxu0 0.0
    %614 = vmatpush1.msra.mxu0 0.0
    %615 = vmatprep.subr.mxu0 0.0
    %616 = vmatpush1.msra.mxu0 0.0
    %617 = vmatprep.subr.mxu0 0.0
    %618 = vmatpush1.msra.mxu0 0.0
    %619 = vmatprep.subr.mxu0 0.0
    %620 = vmatpush1.msra.mxu0 0.0
    %621 = vmatprep.subr.mxu0 0.0
    %622 = vmatpush1.msra.mxu0 0.0
    %623 = vmatprep.subr.mxu0 0.0
    %624 = vmatpush1.msra.mxu0 0.0
    %625 = vmatprep.subr.mxu0 0.0
    %626 = vmatpush1.msra.mxu0 0.0
    %627 = vmatprep.subr.mxu0 0.0
    %628 = vmatpush1.msra.mxu0 0.0
    %629 = vmatprep.subr.mxu0 0.0
    %v630 = vand.u32 %v518, 4294901760
    %v631 = vsub.f32 %v518, %v630
    %v632 = vand.u32 %v631, 4294901760
    %v633 = vsub.f32 %v631, %v632
    %v634 = vand.u32 %v633, 4294901760
    %635 = vmatpush1.msra.mxu0 %v634
    %636 = vmatprep.subr.mxu0 0.0
    %v637 = vand.u32 %v517, 4294901760
    %v638 = vsub.f32 %v517, %v637
    %v639 = vand.u32 %v638, 4294901760
    %v640 = vsub.f32 %v638, %v639
    %v641 = vand.u32 %v640, 4294901760
    %642 = vmatpush1.msra.mxu0 %v641
    %643 = vmatprep.subr.mxu0 0.0
    %v644 = vand.u32 %v516, 4294901760
    %v645 = vsub.f32 %v516, %v644
    %v646 = vand.u32 %v645, 4294901760
    %v647 = vsub.f32 %v645, %v646
    %v648 = vand.u32 %v647, 4294901760
    %649 = vmatpush1.msra.mxu0 %v648
    %650 = vmatprep.subr.mxu0 0.0
    %v651 = vand.u32 %v515, 4294901760
    %v652 = vsub.f32 %v515, %v651
    %v653 = vand.u32 %v652, 4294901760
    %v654 = vsub.f32 %v652, %v653
    %v655 = vand.u32 %v654, 4294901760
    %656 = vmatpush1.msra.mxu0 %v655
    %657 = vmatprep.subr.mxu0 0.0
    %v658 = vand.u32 %v514, 4294901760
    %v659 = vsub.f32 %v514, %v658
    %v660 = vand.u32 %v659, 4294901760
    %v661 = vsub.f32 %v659, %v660
    %v662 = vand.u32 %v661, 4294901760
    %663 = vmatpush1.msra.mxu0 %v662
    %664 = vmatprep.subr.mxu0 0.0
    %v665 = vand.u32 %v513, 4294901760
    %v666 = vsub.f32 %v513, %v665
    %v667 = vand.u32 %v666, 4294901760
    %v668 = vsub.f32 %v666, %v667
    %v669 = vand.u32 %v668, 4294901760
    %670 = vmatpush1.msra.mxu0 %v669
    %671 = vmatprep.subr.mxu0 0.0
    %v672 = vand.u32 %v512, 4294901760
    %v673 = vsub.f32 %v512, %v672
    %v674 = vand.u32 %v673, 4294901760
    %v675 = vsub.f32 %v673, %v674
    %v676 = vand.u32 %v675, 4294901760
    %677 = vmatpush1.msra.mxu0 %v676
    %678 = vmatprep.subr.mxu0 0.0
    %v679 = vand.u32 %v511, 4294901760
    %v680 = vsub.f32 %v511, %v679
    %v681 = vand.u32 %v680, 4294901760
    %v682 = vsub.f32 %v680, %v681
    %v683 = vand.u32 %v682, 4294901760
    %684 = vmatpush1.msra.mxu0 %v683
    %685 = vmatprep.subr.mxu0 0.0
    %686 = vmatpush2.msra.mxu0 0.0
    %687 = vmatprep.subr.mxu0 0.0
    %688 = vmatpush2.msra.mxu0 0.0
    %689 = vmatprep.subr.mxu0 0.0
    %690 = vmatpush2.msra.mxu0 0.0
    %691 = vmatprep.subr.mxu0 0.0
    %692 = vmatpush2.msra.mxu0 0.0
    %693 = vmatprep.subr.mxu0 0.0
    %694 = vmatpush2.msra.mxu0 0.0
    %695 = vmatprep.subr.mxu0 0.0
    %696 = vmatpush2.msra.mxu0 0.0
    %697 = vmatprep.subr.mxu0 0.0
    %698 = vmatpush2.msra.mxu0 0.0
    %699 = vmatprep.subr.mxu0 0.0
    %700 = vmatpush2.msra.mxu0 0.0
    %701 = vmatprep.subr.mxu0 0.0
    %702 = vmatpush2.msra.mxu0 0.0
    %703 = vmatprep.subr.mxu0 0.0
    %704 = vmatpush2.msra.mxu0 0.0
    %705 = vmatprep.subr.mxu0 0.0
    %706 = vmatpush2.msra.mxu0 0.0
    %707 = vmatprep.subr.mxu0 0.0
    %708 = vmatpush2.msra.mxu0 0.0
    %709 = vmatprep.subr.mxu0 0.0
    %710 = vmatpush2.msra.mxu0 0.0
    %711 = vmatprep.subr.mxu0 0.0
    %712 = vmatpush2.msra.mxu0 0.0
    %713 = vmatprep.subr.mxu0 0.0
    %714 = vmatpush2.msra.mxu0 0.0
    %715 = vmatprep.subr.mxu0 0.0
    %716 = vmatpush2.msra.mxu0 0.0
    %717 = vmatprep.mubr.f32.mxu0 0.0
    %v718 = vand.u32 %v528, 4294901760
    %719 = vmatmul.mubr.f32.gmra.mxu0 %v718
    %v720 = vpop.f32.mrf.mxu0
    %v721 = vadd.f32 %v610, %v720
    %v722 = vpop.f32.mrf.mxu0
    %723 = vdwg.mxu0
    %724 = vmatprep.subr.mxu0 0.0
    %725 = vmatpush1.msra.mxu0 0.0
    %726 = vmatprep.subr.mxu0 0.0
    %727 = vmatpush1.msra.mxu0 0.0
    %728 = vmatprep.subr.mxu0 0.0
    %729 = vmatpush1.msra.mxu0 0.0
    %730 = vmatprep.subr.mxu0 0.0
    %731 = vmatpush1.msra.mxu0 0.0
    %732 = vmatprep.subr.mxu0 0.0
    %733 = vmatpush1.msra.mxu0 0.0
    %734 = vmatprep.subr.mxu0 0.0
    %735 = vmatpush1.msra.mxu0 0.0
    %736 = vmatprep.subr.mxu0 0.0
    %737 = vmatpush1.msra.mxu0 0.0
    %738 = vmatprep.subr.mxu0 0.0
    %739 = vmatpush1.msra.mxu0 0.0
    %740 = vmatprep.subr.mxu0 0.0
    %v741 = vand.u32 %v518, 4294901760
    %v742 = vsub.f32 %v518, %v741
    %743 = vmatpush1.msra.mxu0 %v742
    %744 = vmatprep.subr.mxu0 0.0
    %v745 = vand.u32 %v517, 4294901760
    %v746 = vsub.f32 %v517, %v745
    %747 = vmatpush1.msra.mxu0 %v746
    %748 = vmatprep.subr.mxu0 0.0
    %v749 = vand.u32 %v516, 4294901760
    %v750 = vsub.f32 %v516, %v749
    %751 = vmatpush1.msra.mxu0 %v750
    %752 = vmatprep.subr.mxu0 0.0
    %v753 = vand.u32 %v515, 4294901760
    %v754 = vsub.f32 %v515, %v753
    %755 = vmatpush1.msra.mxu0 %v754
    %756 = vmatprep.subr.mxu0 0.0
    %v757 = vand.u32 %v514, 4294901760
    %v758 = vsub.f32 %v514, %v757
    %759 = vmatpush1.msra.mxu0 %v758
    %760 = vmatprep.subr.mxu0 0.0
    %v761 = vand.u32 %v513, 4294901760
    %v762 = vsub.f32 %v513, %v761
    %763 = vmatpush1.msra.mxu0 %v762
    %764 = vmatprep.subr.mxu0 0.0
    %v765 = vand.u32 %v512, 4294901760
    %v766 = vsub.f32 %v512, %v765
    %767 = vmatpush1.msra.mxu0 %v766
    %768 = vmatprep.subr.mxu0 0.0
    %v769 = vand.u32 %v511, 4294901760
    %v770 = vsub.f32 %v511, %v769
    %771 = vmatpush1.msra.mxu0 %v770
    %772 = vmatprep.subr.mxu0 0.0
    %773 = vmatpush2.msra.mxu0 0.0
    %774 = vmatprep.subr.mxu0 0.0
    %775 = vmatpush2.msra.mxu0 0.0
    %776 = vmatprep.subr.mxu0 0.0
    %777 = vmatpush2.msra.mxu0 0.0
    %778 = vmatprep.subr.mxu0 0.0
    %779 = vmatpush2.msra.mxu0 0.0
    %780 = vmatprep.subr.mxu0 0.0
    %781 = vmatpush2.msra.mxu0 0.0
    %782 = vmatprep.subr.mxu0 0.0
    %783 = vmatpush2.msra.mxu0 0.0
    %784 = vmatprep.subr.mxu0 0.0
    %785 = vmatpush2.msra.mxu0 0.0
    %786 = vmatprep.subr.mxu0 0.0
    %787 = vmatpush2.msra.mxu0 0.0
    %788 = vmatprep.subr.mxu0 0.0
    %789 = vmatpush2.msra.mxu0 0.0
    %790 = vmatprep.subr.mxu0 0.0
    %791 = vmatpush2.msra.mxu0 0.0
    %792 = vmatprep.subr.mxu0 0.0
    %793 = vmatpush2.msra.mxu0 0.0
    %794 = vmatprep.subr.mxu0 0.0
    %795 = vmatpush2.msra.mxu0 0.0
    %796 = vmatprep.subr.mxu0 0.0
    %797 = vmatpush2.msra.mxu0 0.0
    %798 = vmatprep.subr.mxu0 0.0
    %799 = vmatpush2.msra.mxu0 0.0
    %800 = vmatprep.subr.mxu0 0.0
    %801 = vmatpush2.msra.mxu0 0.0
    %802 = vmatprep.subr.mxu0 0.0
    %803 = vmatpush2.msra.mxu0 0.0
    %804 = vmatprep.mubr.f32.mxu0 0.0
    %v805 = vand.u32 %v528, 4294901760
    %v806 = vsub.f32 %v528, %v805
    %807 = vmatmul.mubr.f32.gmra.mxu0 %v806
    %v808 = vpop.f32.mrf.mxu0
    %v809 = vadd.f32 %v721, %v808
    %v810 = vpop.f32.mrf.mxu0
    %811 = vdwg.mxu0
    %812 = vmatprep.subr.mxu0 0.0
    %813 = vmatpush1.msra.mxu0 0.0
    %814 = vmatprep.subr.mxu0 0.0
    %815 = vmatpush1.msra.mxu0 0.0
    %816 = vmatprep.subr.mxu0 0.0
    %817 = vmatpush1.msra.mxu0 0.0
    %818 = vmatprep.subr.mxu0 0.0
    %819 = vmatpush1.msra.mxu0 0.0
    %820 = vmatprep.subr.mxu0 0.0
    %821 = vmatpush1.msra.mxu0 0.0
    %822 = vmatprep.subr.mxu0 0.0
    %823 = vmatpush1.msra.mxu0 0.0
    %824 = vmatprep.subr.mxu0 0.0
    %825 = vmatpush1.msra.mxu0 0.0
    %826 = vmatprep.subr.mxu0 0.0
    %827 = vmatpush1.msra.mxu0 0.0
    %828 = vmatprep.subr.mxu0 0.0
    %v829 = vand.u32 %v518, 4294901760
    %830 = vmatpush1.msra.mxu0 %v829
    %831 = vmatprep.subr.mxu0 0.0
    %v832 = vand.u32 %v517, 4294901760
    %833 = vmatpush1.msra.mxu0 %v832
    %834 = vmatprep.subr.mxu0 0.0
    %v835 = vand.u32 %v516, 4294901760
    %836 = vmatpush1.msra.mxu0 %v835
    %837 = vmatprep.subr.mxu0 0.0
    %v838 = vand.u32 %v515, 4294901760
    %839 = vmatpush1.msra.mxu0 %v838
    %840 = vmatprep.subr.mxu0 0.0
    %v841 = vand.u32 %v514, 4294901760
    %842 = vmatpush1.msra.mxu0 %v841
    %843 = vmatprep.subr.mxu0 0.0
    %v844 = vand.u32 %v513, 4294901760
    %845 = vmatpush1.msra.mxu0 %v844
    %846 = vmatprep.subr.mxu0 0.0
    %v847 = vand.u32 %v512, 4294901760
    %848 = vmatpush1.msra.mxu0 %v847
    %849 = vmatprep.subr.mxu0 0.0
    %v850 = vand.u32 %v511, 4294901760
    %851 = vmatpush1.msra.mxu0 %v850
    %852 = vmatprep.subr.mxu0 0.0
    %853 = vmatpush2.msra.mxu0 0.0
    %854 = vmatprep.subr.mxu0 0.0
    %855 = vmatpush2.msra.mxu0 0.0
    %856 = vmatprep.subr.mxu0 0.0
    %857 = vmatpush2.msra.mxu0 0.0
    %858 = vmatprep.subr.mxu0 0.0
    %859 = vmatpush2.msra.mxu0 0.0
    %860 = vmatprep.subr.mxu0 0.0
    %861 = vmatpush2.msra.mxu0 0.0
    %862 = vmatprep.subr.mxu0 0.0
    %863 = vmatpush2.msra.mxu0 0.0
    %864 = vmatprep.subr.mxu0 0.0
    %865 = vmatpush2.msra.mxu0 0.0
    %866 = vmatprep.subr.mxu0 0.0
    %867 = vmatpush2.msra.mxu0 0.0
    %868 = vmatprep.subr.mxu0 0.0
    %869 = vmatpush2.msra.mxu0 0.0
    %870 = vmatprep.subr.mxu0 0.0
    %871 = vmatpush2.msra.mxu0 0.0
    %872 = vmatprep.subr.mxu0 0.0
    %873 = vmatpush2.msra.mxu0 0.0
    %874 = vmatprep.subr.mxu0 0.0
    %875 = vmatpush2.msra.mxu0 0.0
    %876 = vmatprep.subr.mxu0 0.0
    %877 = vmatpush2.msra.mxu0 0.0
    %878 = vmatprep.subr.mxu0 0.0
    %879 = vmatpush2.msra.mxu0 0.0
    %880 = vmatprep.subr.mxu0 0.0
    %881 = vmatpush2.msra.mxu0 0.0
    %882 = vmatprep.subr.mxu0 0.0
    %883 = vmatpush2.msra.mxu0 0.0
    %884 = vmatprep.mubr.f32.mxu0 0.0
    %v885 = vand.u32 %v528, 4294901760
    %v886 = vsub.f32 %v528, %v885
    %v887 = vand.u32 %v886, 4294901760
    %888 = vmatmul.mubr.f32.gmra.mxu0 %v887
    %v889 = vpop.f32.mrf.mxu0
    %v890 = vadd.f32 %v809, %v889
    %v891 = vpop.f32.mrf.mxu0
    %892 = vdwg.mxu0
    %893 = vmatprep.subr.mxu0 0.0
    %894 = vmatpush1.msra.mxu0 0.0
    %895 = vmatprep.subr.mxu0 0.0
    %896 = vmatpush1.msra.mxu0 0.0
    %897 = vmatprep.subr.mxu0 0.0
    %898 = vmatpush1.msra.mxu0 0.0
    %899 = vmatprep.subr.mxu0 0.0
    %900 = vmatpush1.msra.mxu0 0.0
    %901 = vmatprep.subr.mxu0 0.0
    %902 = vmatpush1.msra.mxu0 0.0
    %903 = vmatprep.subr.mxu0 0.0
    %904 = vmatpush1.msra.mxu0 0.0
    %905 = vmatprep.subr.mxu0 0.0
    %906 = vmatpush1.msra.mxu0 0.0
    %907 = vmatprep.subr.mxu0 0.0
    %908 = vmatpush1.msra.mxu0 0.0
    %909 = vmatprep.subr.mxu0 0.0
    %v910 = vand.u32 %v518, 4294901760
    %v911 = vsub.f32 %v518, %v910
    %v912 = vand.u32 %v911, 4294901760
    %913 = vmatpush1.msra.mxu0 %v912
    %914 = vmatprep.subr.mxu0 0.0
    %v915 = vand.u32 %v517, 4294901760
    %v916 = vsub.f32 %v517, %v915
    %v917 = vand.u32 %v916, 4294901760
    %918 = vmatpush1.msra.mxu0 %v917
    %919 = vmatprep.subr.mxu0 0.0
    %v920 = vand.u32 %v516, 4294901760
    %v921 = vsub.f32 %v516, %v920
    %v922 = vand.u32 %v921, 4294901760
    %923 = vmatpush1.msra.mxu0 %v922
    %924 = vmatprep.subr.mxu0 0.0
    %v925 = vand.u32 %v515, 4294901760
    %v926 = vsub.f32 %v515, %v925
    %v927 = vand.u32 %v926, 4294901760
    %928 = vmatpush1.msra.mxu0 %v927
    %929 = vmatprep.subr.mxu0 0.0
    %v930 = vand.u32 %v514, 4294901760
    %v931 = vsub.f32 %v514, %v930
    %v932 = vand.u32 %v931, 4294901760
    %933 = vmatpush1.msra.mxu0 %v932
    %934 = vmatprep.subr.mxu0 0.0
    %v935 = vand.u32 %v513, 4294901760
    %v936 = vsub.f32 %v513, %v935
    %v937 = vand.u32 %v936, 4294901760
    %938 = vmatpush1.msra.mxu0 %v937
    %939 = vmatprep.subr.mxu0 0.0
    %v940 = vand.u32 %v512, 4294901760
    %v941 = vsub.f32 %v512, %v940
    %v942 = vand.u32 %v941, 4294901760
    %943 = vmatpush1.msra.mxu0 %v942
    %944 = vmatprep.subr.mxu0 0.0
    %v945 = vand.u32 %v511, 4294901760
    %v946 = vsub.f32 %v511, %v945
    %v947 = vand.u32 %v946, 4294901760
    %948 = vmatpush1.msra.mxu0 %v947
    %949 = vmatprep.subr.mxu0 0.0
    %950 = vmatpush2.msra.mxu0 0.0
    %951 = vmatprep.subr.mxu0 0.0
    %952 = vmatpush2.msra.mxu0 0.0
    %953 = vmatprep.subr.mxu0 0.0
    %954 = vmatpush2.msra.mxu0 0.0
    %955 = vmatprep.subr.mxu0 0.0
    %956 = vmatpush2.msra.mxu0 0.0
    %957 = vmatprep.subr.mxu0 0.0
    %958 = vmatpush2.msra.mxu0 0.0
    %959 = vmatprep.subr.mxu0 0.0
    %960 = vmatpush2.msra.mxu0 0.0
    %961 = vmatprep.subr.mxu0 0.0
    %962 = vmatpush2.msra.mxu0 0.0
    %963 = vmatprep.subr.mxu0 0.0
    %964 = vmatpush2.msra.mxu0 0.0
    %965 = vmatprep.subr.mxu0 0.0
    %966 = vmatpush2.msra.mxu0 0.0
    %967 = vmatprep.subr.mxu0 0.0
    %968 = vmatpush2.msra.mxu0 0.0
    %969 = vmatprep.subr.mxu0 0.0
    %970 = vmatpush2.msra.mxu0 0.0
    %971 = vmatprep.subr.mxu0 0.0
    %972 = vmatpush2.msra.mxu0 0.0
    %973 = vmatprep.subr.mxu0 0.0
    %974 = vmatpush2.msra.mxu0 0.0
    %975 = vmatprep.subr.mxu0 0.0
    %976 = vmatpush2.msra.mxu0 0.0
    %977 = vmatprep.subr.mxu0 0.0
    %978 = vmatpush2.msra.mxu0 0.0
    %979 = vmatprep.subr.mxu0 0.0
    %980 = vmatpush2.msra.mxu0 0.0
    %981 = vmatprep.mubr.f32.mxu0 0.0
    %v982 = vand.u32 %v528, 4294901760
    %983 = vmatmul.mubr.f32.gmra.mxu0 %v982
    %v984 = vpop.f32.mrf.mxu0
    %v985 = vadd.f32 %v890, %v984
    %v986 = vpop.f32.mrf.mxu0
    %987 = vdwg.mxu0
    %988 = vmatprep.subr.mxu0 0.0
    %989 = vmatpush1.msra.mxu0 0.0
    %990 = vmatprep.subr.mxu0 0.0
    %991 = vmatpush1.msra.mxu0 0.0
    %992 = vmatprep.subr.mxu0 0.0
    %993 = vmatpush1.msra.mxu0 0.0
    %994 = vmatprep.subr.mxu0 0.0
    %995 = vmatpush1.msra.mxu0 0.0
    %996 = vmatprep.subr.mxu0 0.0
    %997 = vmatpush1.msra.mxu0 0.0
    %998 = vmatprep.subr.mxu0 0.0
    %999 = vmatpush1.msra.mxu0 0.0
    %1000 = vmatprep.subr.mxu0 0.0
    %1001 = vmatpush1.msra.mxu0 0.0
    %1002 = vmatprep.subr.mxu0 0.0
    %1003 = vmatpush1.msra.mxu0 0.0
    %1004 = vmatprep.subr.mxu0 0.0
    %v1005 = vand.u32 %v518, 4294901760
    %1006 = vmatpush1.msra.mxu0 %v1005
    %1007 = vmatprep.subr.mxu0 0.0
    %v1008 = vand.u32 %v517, 4294901760
    %1009 = vmatpush1.msra.mxu0 %v1008
    %1010 = vmatprep.subr.mxu0 0.0
    %v1011 = vand.u32 %v516, 4294901760
    %1012 = vmatpush1.msra.mxu0 %v1011
    %1013 = vmatprep.subr.mxu0 0.0
    %v1014 = vand.u32 %v515, 4294901760
    %1015 = vmatpush1.msra.mxu0 %v1014
    %1016 = vmatprep.subr.mxu0 0.0
    %v1017 = vand.u32 %v514, 4294901760
    %1018 = vmatpush1.msra.mxu0 %v1017
    %1019 = vmatprep.subr.mxu0 0.0
    %v1020 = vand.u32 %v513, 4294901760
    %1021 = vmatpush1.msra.mxu0 %v1020
    %1022 = vmatprep.subr.mxu0 0.0
    %v1023 = vand.u32 %v512, 4294901760
    %1024 = vmatpush1.msra.mxu0 %v1023
    %1025 = vmatprep.subr.mxu0 0.0
    %v1026 = vand.u32 %v511, 4294901760
    %1027 = vmatpush1.msra.mxu0 %v1026
    %1028 = vmatprep.subr.mxu0 0.0
    %1029 = vmatpush2.msra.mxu0 0.0
    %1030 = vmatprep.subr.mxu0 0.0
    %1031 = vmatpush2.msra.mxu0 0.0
    %1032 = vmatprep.subr.mxu0 0.0
    %1033 = vmatpush2.msra.mxu0 0.0
    %1034 = vmatprep.subr.mxu0 0.0
    %1035 = vmatpush2.msra.mxu0 0.0
    %1036 = vmatprep.subr.mxu0 0.0
    %1037 = vmatpush2.msra.mxu0 0.0
    %1038 = vmatprep.subr.mxu0 0.0
    %1039 = vmatpush2.msra.mxu0 0.0
    %1040 = vmatprep.subr.mxu0 0.0
    %1041 = vmatpush2.msra.mxu0 0.0
    %1042 = vmatprep.subr.mxu0 0.0
    %1043 = vmatpush2.msra.mxu0 0.0
    %1044 = vmatprep.subr.mxu0 0.0
    %1045 = vmatpush2.msra.mxu0 0.0
    %1046 = vmatprep.subr.mxu0 0.0
    %1047 = vmatpush2.msra.mxu0 0.0
    %1048 = vmatprep.subr.mxu0 0.0
    %1049 = vmatpush2.msra.mxu0 0.0
    %1050 = vmatprep.subr.mxu0 0.0
    %1051 = vmatpush2.msra.mxu0 0.0
    %1052 = vmatprep.subr.mxu0 0.0
    %1053 = vmatpush2.msra.mxu0 0.0
    %1054 = vmatprep.subr.mxu0 0.0
    %1055 = vmatpush2.msra.mxu0 0.0
    %1056 = vmatprep.subr.mxu0 0.0
    %1057 = vmatpush2.msra.mxu0 0.0
    %1058 = vmatprep.subr.mxu0 0.0
    %1059 = vmatpush2.msra.mxu0 0.0
    %1060 = vmatprep.mubr.f32.mxu0 0.0
    %v1061 = vand.u32 %v528, 4294901760
    %1062 = vmatmul.mubr.f32.gmra.mxu0 %v1061
    %v1063 = vpop.f32.mrf.mxu0
    %v1064 = vadd.f32 %v985, %v1063
    %v1065 = vpop.f32.mrf.mxu0
    %1066 = vdwg.mxu0
    %v1067 = vtanh.pop %v1064
    %v1068 = vmul.f32 %v1067, 2.0
    %vm1069 = vcmask 15360
    %1070 = vst.msk [vmem:[%s5] sm:$0xff] %vm1069, %v1068
    // Predicated region
    $region26: #{tpu_custom_call.1} parent=1 // pred_check
      _
    $region27: #{tpu_custom_call.1} parent=1 // pred_check_branch
      %1072 = sbr.rel (0) target = $region29
    $region28: #{tpu_custom_call.1} parent=1 // pred_region
      _
    $region29: #{tpu_custom_call.1} parent=1 // pred_fallthru
      _
    // Predicated region
    $region30: #{tpu_custom_call.1} parent=1 // pred_check
      _
    $region31: #{tpu_custom_call.1} parent=1 // pred_check_branch
      %1074 = sbr.rel (0) target = $region33
    $region32: #{tpu_custom_call.1} parent=1 // pred_region
      _
    $region33: #{tpu_custom_call.1} parent=1 // pred_fallthru
      _
    %1075 = vsyncpa [#allocation3], 1

</llo_original>
